<compile_context>
chip_gen: v7x
topology: tpu7x:2x2x1
jax: 0.10.0
libtpu: 0.0.40
codegen_flags: <defaults>
</compile_context>

<pallas_src>
import jax
import jax.numpy as jnp
from jax.experimental import pallas as pl
from jax.experimental.pallas import tpu as pltpu


_NEG_FILL = -1e30  # logits for padded connection lanes -> exp() == 0 in softmax


def _round_up(v, m):
    return ((v + m - 1) // m) * m


def _log_softmax_lastdim(z):
    # numerically stable log_softmax along the connections (lane) axis
    m = jnp.max(z, axis=-1, keepdims=True)
    s = z - m
    lse = jnp.log(jnp.sum(jnp.exp(s), axis=-1, keepdims=True))
    return s - lse


def _where_kernel(x_ref, w_ref, b_ref, pen_ref, cnt_ref,
                  where_ref, modval_ref, values_ref):
    # forward: where_output = x @ W + b   (the wrapped Linear "model")
    where_out = (
        jnp.dot(x_ref[...], w_ref[...], preferred_element_type=jnp.float32)
        + b_ref[...].astype(jnp.float32)
    )
    where_ref[...] = where_out.astype(where_ref.dtype)

    # penalty_toback (forward values only).
    # TODO(synk): PyTorch applies the penalty to *detached* logits; if this
    # kernel is ever differentiated, wrap the penalty path in stop_gradient /
    # a custom_vjp to match those semantics.
    # Fuse both per-connection factors into ONE [1, C] scale vector so only a
    # single [TB, C] broadcast multiply hits the VPU.
    scale = pen_ref[...].astype(jnp.float32) / (
        jnp.log1p(cnt_ref[...].astype(jnp.float32)) + 1.0)
    mod = where_out * scale

    modval_ref[...] = _log_softmax_lastdim(mod).astype(modval_ref.dtype)
    values_ref[...] = _log_softmax_lastdim(where_out).astype(values_ref.dtype)


def _choose_block_b(b_rounded, h, c_pad):
    # Size the batch tile for the smallest-VMEM generation (v7x: 64 MiB):
    # keep resident W/bias/pen/cnt + double-buffered x tile + 3 double-buffered
    # f32 output tiles under ~32 MiB.
    budget = 32 * 1024 * 1024
    resident = h * c_pad * 4 + 3 * c_pad * 4
    per_row = 2 * h * 4 + 2 * 3 * c_pad * 4
    tb = (budget - resident) // max(per_row, 1)
    tb = min(tb, 1024, b_rounded)
    tb = max(8, (tb // 8) * 8)
    return tb


def where_model(x, w, b, penalized_connections, count_connections,
                *, compute_dtype=jnp.float32, out_dtype=jnp.float32):
    """Fused forward + penalty_toback.

    x: [B, H], w: [H, C], b / penalized_connections / count_connections: [1, C].
    Returns (where_output[f32], modval[out_dtype], values[out_dtype]), each [B, C].
    """
    B, H = x.shape
    _, C = w.shape

    # lane-dense padding: C -> multiple of 128, B -> multiple of the batch tile
    Cp = _round_up(C, 128)
    tb = _choose_block_b(_round_up(B, 8), H, Cp)
    Bp = _round_up(B, tb)

    xp = x.astype(compute_dtype)
    wp = w.astype(compute_dtype)
    bp, penp, cntp = b, penalized_connections, count_connections
    if Bp != B:
        xp = jnp.pad(xp, ((0, Bp - B), (0, 0)))
    if Cp != C:
        pad_c = ((0, 0), (0, Cp - C))
        wp = jnp.pad(wp, ((0, 0), (0, Cp - C)))
        bp = jnp.pad(bp, pad_c, constant_values=_NEG_FILL)   # kill padded lanes in softmax
        penp = jnp.pad(penp, pad_c, constant_values=1.0)
        cntp = jnp.pad(cntp, pad_c, constant_values=0.0)

    grid = (Bp // tb,)
    row_spec = pl.BlockSpec((1, Cp), lambda i: (0, 0))        # VMEM-resident across steps
    out_spec = pl.BlockSpec((tb, Cp), lambda i: (i, 0))

    where_p, modval_p, values_p = pl.pallas_call(
        _where_kernel,
        out_shape=(
            jax.ShapeDtypeStruct((Bp, Cp), jnp.float32),      # where_output
            jax.ShapeDtypeStruct((Bp, Cp), out_dtype),        # modval
            jax.ShapeDtypeStruct((Bp, Cp), out_dtype),        # values
        ),
        grid=grid,
        in_specs=[
            pl.BlockSpec((tb, H), lambda i: (i, 0)),          # x: batch-tiled
            pl.BlockSpec((H, Cp), lambda i: (0, 0)),          # W: resident
            row_spec,                                          # bias
            row_spec,                                          # penalized_connections
            row_spec,                                          # count_connections
        ],
        out_specs=(out_spec, out_spec, out_spec),
        compiler_params=pltpu.CompilerParams(
            dimension_semantics=("parallel",),
            vmem_limit_bytes=48 * 1024 * 1024,
        ),
    )(xp, wp, bp, penp, cntp)

    return (where_p[:B, :C], modval_p[:B, :C], values_p[:B, :C])


def _reference(x, w, b, pen, cnt, compute_dtype=jnp.float32):
    where_out = jnp.dot(x.astype(compute_dtype), w.astype(compute_dtype),
                        preferred_element_type=jnp.float32) + b
    scale = pen / (jnp.log1p(cnt) + 1.0)
    mod = where_out * scale
    return (where_out,
            jax.nn.log_softmax(mod, axis=-1),
            jax.nn.log_softmax(where_out, axis=-1))


if __name__ == "__main__":
    B, HIDDEN, CONN = 8, 32, 128   # batch, hidden, number of connections

    key = jax.random.PRNGKey(0)
    kx, kw, kb, kp, kc = jax.random.split(key, 5)

    x = jax.random.normal(kx, (B, HIDDEN), dtype=jnp.float32)
    # deterministic "model" parameters (Linear hidden -> connections)
    w = 0.1 * jax.random.normal(kw, (HIDDEN, CONN), dtype=jnp.float32)
    b = 0.05 * jax.random.normal(kb, (1, CONN), dtype=jnp.float32)
    # per-connection penalty state
    penalized_connections = jax.random.uniform(kp, (1, CONN), dtype=jnp.float32,
                                               minval=0.1, maxval=1.0)
    count_connections = jax.random.randint(kc, (1, CONN), 0, 10).astype(jnp.float32)

    # --- f32 path, aligned shapes ---
    outs = where_model(x, w, b, penalized_connections, count_connections)
    jax.block_until_ready(outs)
    refs = _reference(x, w, b, penalized_connections, count_connections)
    for o, r in zip(outs, refs):
        assert jnp.allclose(o, r, atol=1e-4, rtol=1e-4)

    # --- ragged shapes: exercises the lane/sublane padding path ---
    B2, C2 = 5, 100
    x2 = x[:B2]
    w2, b2 = w[:, :C2], b[:, :C2]
    pen2, cnt2 = penalized_connections[:, :C2], count_connections[:, :C2]
    outs2 = where_model(x2, w2, b2, pen2, cnt2)
    jax.block_until_ready(outs2)
    refs2 = _reference(x2, w2, b2, pen2, cnt2)
    for o, r in zip(outs2, refs2):
        assert o.shape == (B2, C2)
        assert jnp.allclose(o, r, atol=1e-4, rtol=1e-4)

    # --- bf16 MXU path (checked against a bf16-input reference) ---
    outs3 = where_model(x, w, b, penalized_connections, count_connections,
                        compute_dtype=jnp.bfloat16)
    jax.block_until_ready(outs3)
    refs3 = _reference(x, w, b, penalized_connections, count_connections,
                       compute_dtype=jnp.bfloat16)
    for o, r in zip(outs3, refs3):
        assert jnp.allclose(o, r, atol=2e-3, rtol=2e-3)

    print("KERNEL_OK")
</pallas_src>

<mosaic_0001>
module attributes {stable_mosaic.version = 11 : i64} {
  func.func @_where_kernel(%arg0: i32, %arg1: memref<8x32xf32, #tpu.memory_space<vmem>>, %arg2: memref<32x128xf32, #tpu.memory_space<vmem>>, %arg3: memref<1x128xf32, #tpu.memory_space<vmem>>, %arg4: memref<1x128xf32, #tpu.memory_space<vmem>>, %arg5: memref<1x128xf32, #tpu.memory_space<vmem>>, %arg6: memref<8x128xf32, #tpu.memory_space<vmem>>, %arg7: memref<8x128xf32, #tpu.memory_space<vmem>>, %arg8: memref<8x128xf32, #tpu.memory_space<vmem>>) attributes {dimension_semantics = [#tpu.dimension_semantics<parallel>], iteration_bounds = array<i64: 1>, scalar_prefetch = 0 : i64, scratch_operands = 0 : i64, tpu.core_type = #tpu.core_type<tc>, window_params = [{transform_indices = @transform_0, window_bounds = array<i64: 8, 32>}, {pipeline_mode = #tpu.pipeline_mode<synchronous>, transform_indices = @transform_1, window_bounds = array<i64: 32, 128>}, {pipeline_mode = #tpu.pipeline_mode<synchronous>, transform_indices = @transform_2, window_bounds = array<i64: 1, 128>}, {pipeline_mode = #tpu.pipeline_mode<synchronous>, transform_indices = @transform_3, window_bounds = array<i64: 1, 128>}, {pipeline_mode = #tpu.pipeline_mode<synchronous>, transform_indices = @transform_4, window_bounds = array<i64: 1, 128>}, {transform_indices = @transform_5, window_bounds = array<i64: 8, 128>}, {transform_indices = @transform_6, window_bounds = array<i64: 8, 128>}, {transform_indices = @transform_7, window_bounds = array<i64: 8, 128>}]} {
    %c0 = arith.constant 0 : index
    %c0_0 = arith.constant 0 : index
    %0 = vector.load %arg1[%c0, %c0_0] : memref<8x32xf32, #tpu.memory_space<vmem>>, vector<8x32xf32>
    %c0_1 = arith.constant 0 : index
    %c0_2 = arith.constant 0 : index
    %1 = vector.load %arg2[%c0_1, %c0_2] : memref<32x128xf32, #tpu.memory_space<vmem>>, vector<32x128xf32>
    %cst = arith.constant dense<0.000000e+00> : vector<8x128xf32>
    %2 = tpu.matmul %0, %1, %cst {dimension_numbers = #tpu.dot_dimension_numbers<[1], [0], [0], [1], [0, 0, 1, 1], [], []>} : vector<8x32xf32>, vector<32x128xf32>, vector<8x128xf32> -> vector<8x128xf32>
    %c0_3 = arith.constant 0 : index
    %c0_4 = arith.constant 0 : index
    %3 = vector.load %arg3[%c0_3, %c0_4] : memref<1x128xf32, #tpu.memory_space<vmem>>, vector<1x128xf32>
    %4 = vector.broadcast %3 : vector<1x128xf32> to vector<8x128xf32>
    %5 = arith.addf %2, %4 : vector<8x128xf32>
    %c0_5 = arith.constant 0 : index
    %c0_6 = arith.constant 0 : index
    %6 = vector.load %arg6[%c0_5, %c0_6] : memref<8x128xf32, #tpu.memory_space<vmem>>, vector<8x128xf32>
    tpu.vector_store %arg6[%c0_5, %c0_6], %5 {strides = array<i32>} : memref<8x128xf32, #tpu.memory_space<vmem>>, vector<8x128xf32>,
    %c0_7 = arith.constant 0 : index
    %c0_8 = arith.constant 0 : index
    %7 = vector.load %arg4[%c0_7, %c0_8] : memref<1x128xf32, #tpu.memory_space<vmem>>, vector<1x128xf32>
    %c0_9 = arith.constant 0 : index
    %c0_10 = arith.constant 0 : index
    %8 = vector.load %arg5[%c0_9, %c0_10] : memref<1x128xf32, #tpu.memory_space<vmem>>, vector<1x128xf32>
    %9 = math.log1p %8 : vector<1x128xf32>
    %cst_11 = arith.constant 1.000000e+00 : f32
    %10 = vector.broadcast %cst_11 : f32 to vector<1x128xf32>
    %11 = arith.addf %9, %10 : vector<1x128xf32>
    %12 = arith.divf %7, %11 : vector<1x128xf32>
    %13 = vector.broadcast %12 : vector<1x128xf32> to vector<8x128xf32>
    %14 = arith.mulf %5, %13 : vector<8x128xf32>
    %cst_12 = arith.constant dense<0xFF800000> : vector<8xf32>
    %15 = vector.multi_reduction <maximumf>, %14, %cst_12 [1] : vector<8x128xf32> to vector<8xf32>
    %16 = vector.shape_cast %15 : vector<8xf32> to vector<8x1xf32>
    %17 = vector.broadcast %16 : vector<8x1xf32> to vector<8x128xf32>
    %18 = arith.subf %14, %17 : vector<8x128xf32>
    %19 = math.exp %18 : vector<8x128xf32>
    %cst_13 = arith.constant dense<0.000000e+00> : vector<8xf32>
    %20 = vector.multi_reduction <add>, %19, %cst_13 [1] : vector<8x128xf32> to vector<8xf32>
    %21 = vector.shape_cast %20 : vector<8xf32> to vector<8x1xf32>
    %22 = math.log %21 : vector<8x1xf32>
    %23 = vector.broadcast %22 : vector<8x1xf32> to vector<8x128xf32>
    %24 = arith.subf %18, %23 : vector<8x128xf32>
    %c0_14 = arith.constant 0 : index
    %c0_15 = arith.constant 0 : index
    %25 = vector.load %arg7[%c0_14, %c0_15] : memref<8x128xf32, #tpu.memory_space<vmem>>, vector<8x128xf32>
    tpu.vector_store %arg7[%c0_14, %c0_15], %24 {strides = array<i32>} : memref<8x128xf32, #tpu.memory_space<vmem>>, vector<8x128xf32>,
    %cst_16 = arith.constant dense<0xFF800000> : vector<8xf32>
    %26 = vector.multi_reduction <maximumf>, %5, %cst_16 [1] : vector<8x128xf32> to vector<8xf32>
    %27 = vector.shape_cast %26 : vector<8xf32> to vector<8x1xf32>
    %28 = vector.broadcast %27 : vector<8x1xf32> to vector<8x128xf32>
    %29 = arith.subf %5, %28 : vector<8x128xf32>
    %30 = math.exp %29 : vector<8x128xf32>
    %cst_17 = arith.constant dense<0.000000e+00> : vector<8xf32>
    %31 = vector.multi_reduction <add>, %30, %cst_17 [1] : vector<8x128xf32> to vector<8xf32>
    %32 = vector.shape_cast %31 : vector<8xf32> to vector<8x1xf32>
    %33 = math.log %32 : vector<8x1xf32>
    %34 = vector.broadcast %33 : vector<8x1xf32> to vector<8x128xf32>
    %35 = arith.subf %29, %34 : vector<8x128xf32>
    %c0_18 = arith.constant 0 : index
    %c0_19 = arith.constant 0 : index
    %36 = vector.load %arg8[%c0_18, %c0_19] : memref<8x128xf32, #tpu.memory_space<vmem>>, vector<8x128xf32>
    tpu.vector_store %arg8[%c0_18, %c0_19], %35 {strides = array<i32>} : memref<8x128xf32, #tpu.memory_space<vmem>>, vector<8x128xf32>,
    return
  }
  func.func @transform_0(%arg0: i32) -> (i32, i32) {
    %c0_i32 = arith.constant 0 : i32
    %c0_i32_0 = arith.constant 0 : i32
    return %arg0, %c0_i32 : i32, i32
  }
  func.func @transform_1(%arg0: i32) -> (i32, i32) {
    %c0_i32 = arith.constant 0 : i32
    %c0_i32_0 = arith.constant 0 : i32
    %c0_i32_1 = arith.constant 0 : i32
    return %c0_i32, %c0_i32_0 : i32, i32
  }
  func.func @transform_2(%arg0: i32) -> (i32, i32) {
    %c0_i32 = arith.constant 0 : i32
    %c0_i32_0 = arith.constant 0 : i32
    %c0_i32_1 = arith.constant 0 : i32
    return %c0_i32, %c0_i32_0 : i32, i32
  }
  func.func @transform_3(%arg0: i32) -> (i32, i32) {
    %c0_i32 = arith.constant 0 : i32
    %c0_i32_0 = arith.constant 0 : i32
    %c0_i32_1 = arith.constant 0 : i32
    return %c0_i32, %c0_i32_0 : i32, i32
  }
  func.func @transform_4(%arg0: i32) -> (i32, i32) {
    %c0_i32 = arith.constant 0 : i32
    %c0_i32_0 = arith.constant 0 : i32
    %c0_i32_1 = arith.constant 0 : i32
    return %c0_i32, %c0_i32_0 : i32, i32
  }
  func.func @transform_5(%arg0: i32) -> (i32, i32) {
    %c0_i32 = arith.constant 0 : i32
    %c0_i32_0 = arith.constant 0 : i32
    return %arg0, %c0_i32 : i32, i32
  }
  func.func @transform_6(%arg0: i32) -> (i32, i32) {
    %c0_i32 = arith.constant 0 : i32
    %c0_i32_0 = arith.constant 0 : i32
    return %arg0, %c0_i32 : i32, i32
  }
  func.func @transform_7(%arg0: i32) -> (i32, i32) {
    %c0_i32 = arith.constant 0 : i32
    %c0_i32_0 = arith.constant 0 : i32
    return %arg0, %c0_i32 : i32, i32
  }
}

</mosaic_0001>

<llo_original>
// kernel: tpu_custom_call.1
$region0: #{tpu_custom_call.1}
  #allocation0 [shape = 'u32[]', space=smem, size = 0x4, offset = 0x4, fixed_abs, tag = 'smem constant byte address 0x4 - core index']
  #allocation1 [shape = 'u32[144,128]{1,0:T(1,128)}', space=vmem, size = 0x12000, scoped, tag = 'internal scratch']
  %s0 = inlined_call_operand.hbm [shape: f32[8,32], index: 0, kind: input, shape index: {}]
  %s1 = inlined_call_operand.hbm [shape: f32[32,128], index: 1, kind: input, shape index: {}]
  %s2 = inlined_call_operand.vmem [shape: f32[1,128], index: 2, kind: input, shape index: {}]
  %s3 = inlined_call_operand.vmem [shape: f32[1,128], index: 3, kind: input, shape index: {}]
  %s4 = inlined_call_operand.vmem [shape: f32[1,128], index: 4, kind: input, shape index: {}]
  %s5 = inlined_call_operand.hbm [shape: f32[8,128], index: 5, kind: output, shape index: {0}]
  %s6 = inlined_call_operand.hbm [shape: f32[8,128], index: 6, kind: output, shape index: {1}]
  %s7 = inlined_call_operand.hbm [shape: f32[8,128], index: 7, kind: output, shape index: {2}]
  %8 = xla_tuple %s5, %s6, %s7
  %s9 = sld [smem:[#allocation0]]
  $region54: #{tpu_custom_call.1} parent=0
    _
  %s11 = ssub.s32 1, %s9
  %s12 = scalar_select 0, %s11, %s9
  $region1: #{tpu_custom_call.1} parent=0
    #allocation2 [shape = 'u8[4096]{0}', space=vmem, size = 0x1000, scoped, tag = 'input window, operand 0, single buffered']
    #allocation3 [shape = 's32[1]{0}', space=sflag, size = 0x4, scoped, tag = 'scoped memory for tpu_custom_call.1']
    #allocation4 [shape = 's32[1]{0}', space=sflag, size = 0x4, scoped, tag = 'scoped memory for tpu_custom_call.1']
    #allocation5 [shape = 'u8[16384]{0}', space=vmem, size = 0x4000, scoped, tag = 'input window, operand 1, single buffered']
    #allocation6 [shape = 's32[1]{0}', space=sflag, size = 0x4, scoped, tag = 'scoped memory for tpu_custom_call.1']
    #allocation7 [shape = 'u8[4096]{0}', space=vmem, size = 0x1000, scoped, tag = 'output window, operand 0, single buffered']
    #allocation8 [shape = 'u8[4096]{0}', space=vmem, size = 0x1000, scoped, tag = 'output window, operand 1, single buffered']
    #allocation9 [shape = 's32[1]{0}', space=sflag, size = 0x4, scoped, tag = 'scoped memory for tpu_custom_call.1']
    #allocation10 [shape = 'u8[4096]{0}', space=vmem, size = 0x1000, scoped, tag = 'output window, operand 2, single buffered']
    %13 = vsyncpa [#allocation3], 0
    %14 = vsyncpa [#allocation6], 0
    %15 = vsyncpa [#allocation4], 0
    %16 = vsyncpa [#allocation9], 0
    // Predicated region
    $region2: #{tpu_custom_call.1} parent=1 // pred_check
      _
    $region3: #{tpu_custom_call.1} parent=1 // pred_check_branch
      %18 = sbr.rel (0) target = $region5
    $region4: #{tpu_custom_call.1} parent=1 // pred_region
      %s20 = ssub.s32 128, 128
      %21 = vsyncadd [#allocation3], %s20
      %s23 = sshll.u32 [#allocation2], 4
      %s24 = int_to_ptr.vmem [resolvable:$true] %s23
      %26 = dma.hbm_to_vmem [thread:$0]  %s0, 128, %s24, [#allocation3]
    $region5: #{tpu_custom_call.1} parent=1 // pred_fallthru
      _
    // Predicated region
    $region6: #{tpu_custom_call.1} parent=1 // pred_check
      _
    $region7: #{tpu_custom_call.1} parent=1 // pred_check_branch
      %28 = sbr.rel (0) target = $region9
    $region8: #{tpu_custom_call.1} parent=1 // pred_region
      %s30 = ssub.s32 512, 512
      %31 = vsyncadd [#allocation6], %s30
      %s32 = sshll.u32 [#allocation5], 4
      %s33 = int_to_ptr.vmem [resolvable:$true] %s32
      %38 = dma.hbm_to_vmem [thread:$0]  %s1, 512, %s33, [#allocation6], 128, 128, 8
    $region9: #{tpu_custom_call.1} parent=1 // pred_fallthru
      _
    // Predicated region
    $region10: #{tpu_custom_call.1} parent=1 // pred_check
      _
    $region11: #{tpu_custom_call.1} parent=1 // pred_check_branch
      %40 = sbr.rel (0) target = $region13
    $region12: #{tpu_custom_call.1} parent=1 // pred_region
      _
    $region13: #{tpu_custom_call.1} parent=1 // pred_fallthru
      _
    // Predicated region
    $region14: #{tpu_custom_call.1} parent=1 // pred_check
      _
    $region15: #{tpu_custom_call.1} parent=1 // pred_check_branch
      %42 = sbr.rel (0) target = $region17
    $region16: #{tpu_custom_call.1} parent=1 // pred_region
      _
    $region17: #{tpu_custom_call.1} parent=1 // pred_fallthru
      _
    // Predicated region
    $region18: #{tpu_custom_call.1} parent=1 // pred_check
      _
    $region19: #{tpu_custom_call.1} parent=1 // pred_check_branch
      %44 = sbr.rel (0) target = $region21
    $region20: #{tpu_custom_call.1} parent=1 // pred_region
      _
    $region21: #{tpu_custom_call.1} parent=1 // pred_fallthru
      _
    // Predicated region
    $region22: #{tpu_custom_call.1} parent=1 // pred_check
      _
    $region23: #{tpu_custom_call.1} parent=1 // pred_check_branch
      %46 = sbr.rel (0) target = $region25
    $region24: #{tpu_custom_call.1} parent=1 // pred_region
      %47 = dma.done [#allocation3], 128
    $region25: #{tpu_custom_call.1} parent=1 // pred_fallthru
      _
    // Predicated region
    $region26: #{tpu_custom_call.1} parent=1 // pred_check
      _
    $region27: #{tpu_custom_call.1} parent=1 // pred_check_branch
      %49 = sbr.rel (0) target = $region29
    $region28: #{tpu_custom_call.1} parent=1 // pred_region
      %50 = dma.done [#allocation6], 512
    $region29: #{tpu_custom_call.1} parent=1 // pred_fallthru
      _
    %v51 = vld [vmem:[#allocation2] sm:$0xff]
    %v52 = vld [vmem:[#allocation5] sm:$0xff]
    %v53 = vld [vmem:[#allocation5 + $0x8] sm:$0xff]
    %v54 = vld [vmem:[#allocation5 + $0x10] sm:$0xff]
    %v55 = vld [vmem:[#allocation5 + $0x18] sm:$0xff]
    %v56 = vld [vmem:[%s2] sm:$0x1]
    %v58 = vlaneseq
    %v59 = vshrl.u32 %v58, 7
    %v60 = vsub.s32 0, %v59
    %v61 = vrot.slane %v56, %v60
    %vm63 = vcmask 261120
    %v65 = vsel %vm63, %v51, 0
    %67 = vmatprep.subr.mxu0 0.0
    %68 = vmatpush1.msra.mxu0 %v52
    %69 = vmatprep.subr.mxu0 0.0
    %70 = vmatpush1.msra.mxu0 %v53
    %71 = vmatprep.subr.mxu0 0.0
    %72 = vmatpush1.msra.mxu0 %v54
    %73 = vmatprep.subr.mxu0 0.0
    %74 = vmatpush1.msra.mxu0 %v55
    %75 = vmatprep.subr.mxu0 0.0
    %76 = vmatpush1.msra.mxu0 0.0
    %77 = vmatprep.subr.mxu0 0.0
    %78 = vmatpush1.msra.mxu0 0.0
    %79 = vmatprep.subr.mxu0 0.0
    %80 = vmatpush1.msra.mxu0 0.0
    %81 = vmatprep.subr.mxu0 0.0
    %82 = vmatpush1.msra.mxu0 0.0
    %83 = vmatprep.subr.mxu0 0.0
    %84 = vmatpush1.msra.mxu0 0.0
    %85 = vmatprep.subr.mxu0 0.0
    %86 = vmatpush1.msra.mxu0 0.0
    %87 = vmatprep.subr.mxu0 0.0
    %88 = vmatpush1.msra.mxu0 0.0
    %89 = vmatprep.subr.mxu0 0.0
    %90 = vmatpush1.msra.mxu0 0.0
    %91 = vmatprep.subr.mxu0 0.0
    %92 = vmatpush1.msra.mxu0 0.0
    %93 = vmatprep.subr.mxu0 0.0
    %94 = vmatpush1.msra.mxu0 0.0
    %95 = vmatprep.subr.mxu0 0.0
    %96 = vmatpush1.msra.mxu0 0.0
    %97 = vmatprep.subr.mxu0 0.0
    %98 = vmatpush1.msra.mxu0 0.0
    %99 = vmatprep.subr.mxu0 0.0
    %100 = vmatpush1.msra.mxu0 0.0
    %101 = vmatprep.subr.mxu0 0.0
    %102 = vmatpush1.msra.mxu0 0.0
    %103 = vmatprep.subr.mxu0 0.0
    %104 = vmatpush1.msra.mxu0 0.0
    %105 = vmatprep.subr.mxu0 0.0
    %106 = vmatpush1.msra.mxu0 0.0
    %107 = vmatprep.subr.mxu0 0.0
    %108 = vmatpush1.msra.mxu0 0.0
    %109 = vmatprep.subr.mxu0 0.0
    %110 = vmatpush1.msra.mxu0 0.0
    %111 = vmatprep.subr.mxu0 0.0
    %112 = vmatpush1.msra.mxu0 0.0
    %113 = vmatprep.subr.mxu0 0.0
    %114 = vmatpush1.msra.mxu0 0.0
    %115 = vmatprep.subr.mxu0 0.0
    %116 = vmatpush1.msra.mxu0 0.0
    %117 = vmatprep.subr.mxu0 0.0
    %118 = vmatpush1.msra.mxu0 0.0
    %119 = vmatprep.subr.mxu0 0.0
    %120 = vmatpush1.msra.mxu0 0.0
    %121 = vmatprep.subr.mxu0 0.0
    %122 = vmatpush1.msra.mxu0 0.0
    %123 = vmatprep.subr.mxu0 0.0
    %124 = vmatpush1.msra.mxu0 0.0
    %125 = vmatprep.subr.mxu0 0.0
    %126 = vmatpush1.msra.mxu0 0.0
    %127 = vmatprep.subr.mxu0 0.0
    %128 = vmatpush1.msra.mxu0 0.0
    %129 = vmatprep.subr.mxu0 0.0
    %130 = vmatpush1.msra.mxu0 0.0
    %131 = vmatprep.mubr.f32.mxu0 0.0
    %132 = vmatmul.mubr.f32.gmra.mrb[0].mxu0 %v65
    %v133 = vpop.f32.mrb[0].mxu0
    %v134 = vadd.f32 %v61, %v133
    %v135 = vpop.f32.mrb[0].mxu0
    %136 = vdwg.mxu0
    %137 = vst [vmem:[#allocation7] sm:$0xff] %v134
    %v138 = vld [vmem:[%s3] sm:$0x1]
    %v139 = vld [vmem:[%s4] sm:$0x1]
    %v140 = vadd.f32 %v139, 1.0
    %v141 = vlog2.pop %v140
    %v142 = vmul.f32 %v141, 0.6931472
    %v143 = vmul.f32 -0.5, %v139
    %v144 = vadd.f32 %v143, 1.0
    %v145 = vmul.f32 %v144, %v139
    %v146 = vand.u32 2147483647, %v139
    %vm147 = vcmp.lt.f32.partialorder %v146, 0.0004427343
    %v148 = vsel %vm147, %v145, %v142
    %v149 = vadd.f32 %v148, 1.0
    %v150 = vrcp.pop %v149
    %v151 = vmul.f32 %v138, %v150
    %v153 = vlaneseq
    %v154 = vshrl.u32 %v153, 7
    %v155 = vsub.s32 0, %v154
    %v156 = vrot.slane %v151, %v155
    %v158 = vmul.f32 %v134, %v156
    %159 = vmax.xlane.f32.xlu0 %v158
    %v160 = vpop.xlane.xlu0 %159
    %v161 = vsub.f32 %v158, %v160
    %v162 = vmul.f32 %v161, 1.442695
    %v163 = vpow.pop %v162
    %164 = vadd.xlane.f32.xlu0 %v163
    %v165 = vpop.xlane.xlu0 %164
    %v166 = vlog2.pop %v165
    %v167 = vmul.f32 %v166, 0.6931472
    %v168 = vsub.f32 %v161, %v167
    %169 = vst [vmem:[#allocation8] sm:$0xff] %v168
    %170 = vmax.xlane.f32.xlu0 %v134
    %v171 = vpop.xlane.xlu0 %170
    %v172 = vsub.f32 %v134, %v171
    %v173 = vmul.f32 %v172, 1.442695
    %v174 = vpow.pop %v173
    %175 = vadd.xlane.f32.xlu0 %v174
    %v176 = vpop.xlane.xlu0 %175
    %v177 = vlog2.pop %v176
    %v178 = vmul.f32 %v177, 0.6931472
    %v179 = vsub.f32 %v172, %v178
    %180 = vst [vmem:[#allocation10] sm:$0xff] %v179
    // Predicated region
    $region30: #{tpu_custom_call.1} parent=1 // pred_check
      _
    $region31: #{tpu_custom_call.1} parent=1 // pred_check_branch
      %182 = sbr.rel (0) target = $region33
    $region32: #{tpu_custom_call.1} parent=1 // pred_region
      %s184 = ssub.s32 128, 128
      %185 = vsyncadd [#allocation4], %s184
      %s187 = sshll.u32 [#allocation7], 4
      %s188 = int_to_ptr.vmem [resolvable:$true] %s187
      %190 = dma.vmem_to_hbm [thread:$0]  %s188, 128, %s5, [#allocation4]
    $region33: #{tpu_custom_call.1} parent=1 // pred_fallthru
      _
    // Predicated region
    $region34: #{tpu_custom_call.1} parent=1 // pred_check
      _
    $region35: #{tpu_custom_call.1} parent=1 // pred_check_branch
      %192 = sbr.rel (0) target = $region37
    $region36: #{tpu_custom_call.1} parent=1 // pred_region
      %s194 = ssub.s32 128, 128
      %195 = vsyncadd [#allocation9], %s194
      %s197 = sshll.u32 [#allocation8], 4
      %s198 = int_to_ptr.vmem [resolvable:$true] %s197
      %200 = dma.vmem_to_hbm [thread:$0]  %s198, 128, %s6, [#allocation9]
    $region37: #{tpu_custom_call.1} parent=1 // pred_fallthru
      _
    // Predicated region
    $region38: #{tpu_custom_call.1} parent=1 // pred_check
      _
    $region39: #{tpu_custom_call.1} parent=1 // pred_check_branch
      %202 = sbr.rel (0) target = $region41
    $region40: #{tpu_custom_call.1} parent=1 // pred_region
      %s204 = ssub.s32 128, 128
      %205 = vsyncadd [#allocation9], %s204
      %s207 = sshll.u32 [#allocation10], 4
      %s208 = int_to_ptr.vmem [resolvable:$true] %s207
      %210 = dma.vmem_to_hbm [thread:$0]  %s208, 128, %s7, [#allocation9]
    $region41: #{tpu_custom_call.1} parent=1 // pred_fallthru
      _
    // Predicated region
    $region42: #{tpu_custom_call.1} parent=1 // pred_check
      _
    $region43: #{tpu_custom_call.1} parent=1 // pred_check_branch
      %212 = sbr.rel (0) target = $region45
    $region44: #{tpu_custom_call.1} parent=1 // pred_region
      %213 = dma.done [#allocation4], 128
    $region45: #{tpu_custom_call.1} parent=1 // pred_fallthru
      _
    // Predicated region
    $region46: #{tpu_custom_call.1} parent=1 // pred_check
      _
    $region47: #{tpu_custom_call.1} parent=1 // pred_check_branch
      %215 = sbr.rel (0) target = $region49
    $region48: #{tpu_custom_call.1} parent=1 // pred_region
      %216 = dma.done [#allocation9], 128
    $region49: #{tpu_custom_call.1} parent=1 // pred_fallthru
      _
    // Predicated region
    $region50: #{tpu_custom_call.1} parent=1 // pred_check
      _
    $region51: #{tpu_custom_call.1} parent=1 // pred_check_branch
      %218 = sbr.rel (0) target = $region53
    $region52: #{tpu_custom_call.1} parent=1 // pred_region
      %219 = dma.done [#allocation9], 128
    $region53: #{tpu_custom_call.1} parent=1 // pred_fallthru
      _
    %220 = vsyncpa [#allocation3], 1
    %221 = vsyncpa [#allocation6], 1
    %222 = vsyncpa [#allocation4], 1
    %223 = vsyncpa [#allocation9], 1

</llo_original>
